<compile_context>
chip_gen: v5e
topology: v5e:2x2
jax: 0.10.0
libtpu: 0.0.40
codegen_flags: <defaults>
</compile_context>

<pallas_src>
import numpy as np
import jax
import jax.numpy as jnp
from jax.experimental import pallas as pl
from jax.experimental.pallas import tpu as pltpu

_LEVELS = ((1, 1), (2, 2), (3, 3), (6, 6))
_R_TOTAL = sum(oh * ow for oh, ow in _LEVELS)      # 50
_R_PAD = 64                                        # rank dim padded for clean layout
_BN_EPS = 1e-5


# ---------------------------------------------------------------------------
# Constant-operator setup (pure numpy glue, input independent)
# ---------------------------------------------------------------------------
def _adaptive_pool_matrix(L, l):
    """P[i, j] = 1/len(bin_i) if j in PyTorch adaptive-avg-pool bin i (size L -> l)."""
    P = np.zeros((l, L), dtype=np.float32)
    for i in range(l):
        s = (i * L) // l
        e = -((-(i + 1) * L) // l)   # ceil((i+1)*L/l)
        P[i, s:e] = 1.0 / (e - s)
    return P


def _bilinear_upsample_matrix(L, l):
    """U[i, j]: bilinear interp weights, align_corners=True, size l -> L."""
    U = np.zeros((L, l), dtype=np.float32)
    if l == 1:
        U[:, 0] = 1.0
        return U
    for i in range(L):
        src = 0.0 if L == 1 else i * (l - 1) / (L - 1)
        j0 = min(int(np.floor(src)), l - 1)
        j1 = min(j0 + 1, l - 1)
        w1 = src - j0
        U[i, j0] += 1.0 - w1
        U[i, j1] += w1
    return U


def build_separable_operators(H, W):
    """Returns pT (S, R_PAD), uT (R_PAD, S), mask (4, 1, R_PAD), all f32.

    Flattened spatial index s = h*W + w; rank index r concatenates the levels
    (1x1, 2x2, 3x3, 6x6) so that U_all @ (P_all @ x) == sum_k upsample_k(pool_k(x)).
    """
    S = H * W
    pT = np.zeros((S, _R_PAD), np.float32)
    uT = np.zeros((_R_PAD, S), np.float32)
    mask = np.zeros((len(_LEVELS), 1, _R_PAD), np.float32)
    off = 0
    for k, (oh, ow) in enumerate(_LEVELS):
        Pk = np.kron(_adaptive_pool_matrix(H, oh), _adaptive_pool_matrix(W, ow))          # (r, S)
        Uk = np.kron(_bilinear_upsample_matrix(H, oh), _bilinear_upsample_matrix(W, ow))  # (S, r)
        r = oh * ow
        pT[:, off:off + r] = Pk.T
        uT[off:off + r, :] = Uk.T
        mask[k, 0, off:off + r] = 1.0
        off += r
    return jnp.asarray(pT), jnp.asarray(uT), jnp.asarray(mask)


def _pick_tile(total, target, quantum):
    """Largest divisor of `total` that is a multiple of `quantum` and <= target, else total."""
    if total <= target:
        return total
    t = (target // quantum) * quantum
    while t >= quantum:
        if total % t == 0:
            return t
        t -= quantum
    return total


# ---------------------------------------------------------------------------
# Kernels
# ---------------------------------------------------------------------------
def pool_kernel(x_ref, pT_ref, z_ref):
    # grid (N, n_s); reduction over the S tiles:  z[n] += x_tile @ pT_tile   -> (C, R_PAD)
    j = pl.program_id(1)

    @pl.when(j == 0)
    def _():
        z_ref[...] = jnp.zeros_like(z_ref)

    z_ref[0] = z_ref[0] + jnp.dot(x_ref[0], pT_ref[...],
                                  preferred_element_type=jnp.float32)


def pyramid_conv_kernel(z_ref, wpyrT_ref, mask_ref, y_ref):
    # grid (N, n_co);  y[n, co_tile] = sum_k Wk'[co_tile] @ (z[n] * mask_k)  -> (TCO, R_PAD)
    z = z_ref[0]                                                   # (C, R_PAD)
    y = jnp.dot(wpyrT_ref[0], z * mask_ref[0],
                preferred_element_type=jnp.float32)
    for k in range(1, len(_LEVELS)):
        y = y + jnp.dot(wpyrT_ref[k], z * mask_ref[k],
                        preferred_element_type=jnp.float32)
    y_ref[0] = y


def conv_bn_relu_kernel(x_ref, uT_ref, y_ref, w0T_ref, shift_ref, o_ref):
    # grid (N, n_s, n_co);  out = relu(W0' @ x + y @ U^T + shift)   -> (TCO, TS)
    acc = jnp.dot(w0T_ref[...], x_ref[0], preferred_element_type=jnp.float32)
    acc = acc + jnp.dot(y_ref[0], uT_ref[...], preferred_element_type=jnp.float32)
    o_ref[0] = jnp.maximum(acc + shift_ref[...], 0.0).astype(o_ref.dtype)


# ---------------------------------------------------------------------------
# Wrapper
# ---------------------------------------------------------------------------
def spatial_pyramid_pooling(x_nchw, conv_w, gamma, beta, running_mean, running_var,
                            eps=_BN_EPS):
    """x_nchw: (N, C, H, W); conv_w: (Cout, 5*C). Returns (N, Cout, H, W)."""
    N, C, H, W = x_nchw.shape
    Cout = conv_w.shape[0]
    S = H * W

    pT, uT, mask = build_separable_operators(H, W)

    # Fold eval-mode BN scale into the 1x1-conv weights; only the shift stays in-kernel.
    scale = gamma / jnp.sqrt(running_var + eps)                              # (Cout,)
    shift = (beta - running_mean * scale).reshape(Cout, 1).astype(jnp.float32)

    w = conv_w.reshape(Cout, 1 + len(_LEVELS), C).astype(jnp.float32)
    w0T = w[:, 0, :] * scale[:, None]                                        # (Cout, C)
    wpyrT = jnp.transpose(w[:, 1:, :], (1, 0, 2)) * scale[None, :, None]     # (4, Cout, C)

    x_cs = x_nchw.reshape(N, C, S).astype(jnp.float32)   # channels-first; free reshape

    TS = _pick_tile(S, 512, 128)       # spatial tile (lane dim): multiple of 128 or full S
    TCO = _pick_tile(Cout, 256, 128)   # output-channel tile
    n_s = S // TS
    n_co = Cout // TCO

    # --- phase 1: pooled features  z[n] = x_cs[n] @ P^T  ---------------------------------
    z = pl.pallas_call(
        pool_kernel,
        out_shape=jax.ShapeDtypeStruct((N, C, _R_PAD), jnp.float32),
        grid=(N, n_s),
        in_specs=[
            pl.BlockSpec((1, C, TS), lambda n, j: (n, 0, j)),
            pl.BlockSpec((TS, _R_PAD), lambda n, j: (j, 0)),
        ],
        out_specs=pl.BlockSpec((1, C, _R_PAD), lambda n, j: (n, 0, 0)),
        compiler_params=pltpu.CompilerParams(
            dimension_semantics=("parallel", "arbitrary")),
    )(x_cs, pT)

    # --- phase 2: per-level 1x1 conv on the pooled features  y[n] (Cout, R_PAD) ----------
    y = pl.pallas_call(
        pyramid_conv_kernel,
        out_shape=jax.ShapeDtypeStruct((N, Cout, _R_PAD), jnp.float32),
        grid=(N, n_co),
        in_specs=[
            pl.BlockSpec((1, C, _R_PAD), lambda n, co: (n, 0, 0)),
            pl.BlockSpec((len(_LEVELS), TCO, C), lambda n, co: (0, co, 0)),
            pl.BlockSpec((len(_LEVELS), 1, _R_PAD), lambda n, co: (0, 0, 0)),
        ],
        out_specs=pl.BlockSpec((1, TCO, _R_PAD), lambda n, co: (n, co, 0)),
        compiler_params=pltpu.CompilerParams(
            dimension_semantics=("parallel", "parallel")),
    )(z, wpyrT, mask)

    # --- phase 3: identity conv + upsampled pyramid + BN shift + ReLU --------------------
    out_cs = pl.pallas_call(
        conv_bn_relu_kernel,
        out_shape=jax.ShapeDtypeStruct((N, Cout, S), jnp.float32),
        grid=(N, n_s, n_co),
        in_specs=[
            pl.BlockSpec((1, C, TS), lambda n, j, co: (n, 0, j)),
            pl.BlockSpec((_R_PAD, TS), lambda n, j, co: (0, j)),
            pl.BlockSpec((1, TCO, _R_PAD), lambda n, j, co: (n, co, 0)),
            pl.BlockSpec((TCO, C), lambda n, j, co: (co, 0)),
            pl.BlockSpec((TCO, 1), lambda n, j, co: (co, 0)),
        ],
        out_specs=pl.BlockSpec((1, TCO, TS), lambda n, j, co: (n, co, j)),
        compiler_params=pltpu.CompilerParams(
            dimension_semantics=("parallel", "parallel", "parallel")),
    )(x_cs, uT, y, w0T, shift)

    return out_cs.reshape(N, Cout, H, W)


# ---------------------------------------------------------------------------
# Independent pure-JAX reference (gather-based interp, slice-based pooling)
# ---------------------------------------------------------------------------
def _ref_adaptive_avg_pool(x, oh, ow):
    N, C, H, W = x.shape
    rows = []
    for i in range(oh):
        hs, he = (i * H) // oh, -((-(i + 1) * H) // oh)
        cols = []
        for j in range(ow):
            ws, we = (j * W) // ow, -((-(j + 1) * W) // ow)
            cols.append(jnp.mean(x[:, :, hs:he, ws:we], axis=(2, 3)))
        rows.append(jnp.stack(cols, axis=-1))
    return jnp.stack(rows, axis=-2)


def _ref_bilinear_upsample(x, H, W):
    N, C, h, w = x.shape
    si = jnp.zeros((H,), jnp.float32) if h == 1 else jnp.arange(H, dtype=jnp.float32) * (h - 1) / (H - 1)
    sj = jnp.zeros((W,), jnp.float32) if w == 1 else jnp.arange(W, dtype=jnp.float32) * (w - 1) / (W - 1)
    i0 = jnp.clip(jnp.floor(si).astype(jnp.int32), 0, h - 1)
    j0 = jnp.clip(jnp.floor(sj).astype(jnp.int32), 0, w - 1)
    i1 = jnp.minimum(i0 + 1, h - 1)
    j1 = jnp.minimum(j0 + 1, w - 1)
    wi = (si - i0.astype(jnp.float32))[:, None]
    wj = (sj - j0.astype(jnp.float32))[None, :]
    x00 = x[:, :, i0][:, :, :, j0]
    x01 = x[:, :, i0][:, :, :, j1]
    x10 = x[:, :, i1][:, :, :, j0]
    x11 = x[:, :, i1][:, :, :, j1]
    top = x00 * (1 - wj) + x01 * wj
    bot = x10 * (1 - wj) + x11 * wj
    return top * (1 - wi) + bot * wi


def ref_forward(x, conv_w, gamma, beta, mean, var, eps=_BN_EPS):
    N, C, H, W = x.shape
    feats = [x]
    for (oh, ow) in _LEVELS:
        feats.append(_ref_bilinear_upsample(_ref_adaptive_avg_pool(x, oh, ow), H, W))
    cat = jnp.concatenate(feats, axis=1)
    out = jnp.einsum('oc,nchw->nohw', conv_w, cat, precision='highest')
    scale = gamma / jnp.sqrt(var + eps)
    shift = beta - mean * scale
    out = out * scale[None, :, None, None] + shift[None, :, None, None]
    return jnp.maximum(out, 0.0)


if __name__ == "__main__":
    N, C, H, W, Cout = 2, 4, 16, 16, 8
    key = jax.random.PRNGKey(0)
    k1, k2, k3, k4, k5, k6 = jax.random.split(key, 6)

    x = jax.random.normal(k1, (N, C, H, W), jnp.float32)
    conv_w = (jax.random.normal(k2, (Cout, 5 * C, 1, 1), jnp.float32) * 0.2).reshape(Cout, 5 * C)
    gamma = jax.random.uniform(k3, (Cout,), jnp.float32, minval=0.5, maxval=1.5)
    beta = jax.random.normal(k4, (Cout,), jnp.float32) * 0.1
    running_mean = jax.random.normal(k5, (Cout,), jnp.float32) * 0.1
    running_var = jax.random.uniform(k6, (Cout,), jnp.float32, minval=0.5, maxval=1.5)
    # TODO(synk): training-mode BatchNorm (batch statistics) not implemented; eval-mode
    # running-stat BN is fused (scale folded into the conv weights, shift in the epilogue).

    out = spatial_pyramid_pooling(x, conv_w, gamma, beta, running_mean, running_var)
    out = jax.block_until_ready(out)

    ref = ref_forward(x, conv_w, gamma, beta, running_mean, running_var)
    assert out.shape == (N, Cout, H, W)
    # Kernel uses default MXU precision (bf16 multiplies, f32 accumulation) per the perf
    # review; the reference is computed at highest precision, so allow bf16-class error.
    max_err = float(jnp.max(jnp.abs(out - ref)))
    assert max_err < 3e-2, f"mismatch vs reference: {max_err}"
    print("KERNEL_OK")
</pallas_src>

<mosaic_0001>
module attributes {stable_mosaic.version = 11 : i64} {
  func.func @pool_kernel(%arg0: i32, %arg1: i32, %arg2: memref<1x4x256xf32, #tpu.memory_space<vmem>>, %arg3: memref<256x64xf32, #tpu.memory_space<vmem>>, %arg4: memref<1x4x64xf32, #tpu.memory_space<vmem>>) attributes {dimension_semantics = [#tpu.dimension_semantics<parallel>, #tpu.dimension_semantics<arbitrary>], iteration_bounds = array<i64: 2, 1>, scalar_prefetch = 0 : i64, scratch_operands = 0 : i64, tpu.core_type = #tpu.core_type<tc>, window_params = [{transform_indices = @transform_0, window_bounds = array<i64: 1, 4, 256>}, {transform_indices = @transform_1, window_bounds = array<i64: 256, 64>}, {transform_indices = @transform_2, window_bounds = array<i64: 1, 4, 64>}]} {
    %c0_i32 = arith.constant 0 : i32
    %0 = arith.cmpi eq, %arg1, %c0_i32 : i32
    %1 = arith.extui %0 : i1 to i32
    %c0_i32_0 = arith.constant 0 : i32
    %2 = arith.cmpi ne, %1, %c0_i32_0 : i32
    scf.if %2 {
      %cst_11 = arith.constant 0.000000e+00 : f32
      %13 = vector.broadcast %cst_11 : f32 to vector<1x4x64xf32>
      %c0_12 = arith.constant 0 : index
      %c0_13 = arith.constant 0 : index
      %c0_14 = arith.constant 0 : index
      %14 = vector.load %arg4[%c0_12, %c0_13, %c0_14] : memref<1x4x64xf32, #tpu.memory_space<vmem>>, vector<1x4x64xf32>
      tpu.vector_store %arg4[%c0_12, %c0_13, %c0_14], %13 {strides = array<i32>} : memref<1x4x64xf32, #tpu.memory_space<vmem>>, vector<1x4x64xf32>,
    } else {
    }
    %c0 = arith.constant 0 : index
    %c0_1 = arith.constant 0 : index
    %c0_2 = arith.constant 0 : index
    %3 = vector.load %arg4[%c0, %c0_1, %c0_2] : memref<1x4x64xf32, #tpu.memory_space<vmem>>, vector<1x4x64xf32>
    %4 = vector.shape_cast %3 : vector<1x4x64xf32> to vector<4x64xf32>
    %c0_3 = arith.constant 0 : index
    %c0_4 = arith.constant 0 : index
    %c0_5 = arith.constant 0 : index
    %5 = vector.load %arg2[%c0_3, %c0_4, %c0_5] : memref<1x4x256xf32, #tpu.memory_space<vmem>>, vector<1x4x256xf32>
    %6 = vector.shape_cast %5 : vector<1x4x256xf32> to vector<4x256xf32>
    %c0_6 = arith.constant 0 : index
    %c0_7 = arith.constant 0 : index
    %7 = vector.load %arg3[%c0_6, %c0_7] : memref<256x64xf32, #tpu.memory_space<vmem>>, vector<256x64xf32>
    %cst = arith.constant dense<0.000000e+00> : vector<4x64xf32>
    %8 = tpu.matmul %6, %7, %cst {dimension_numbers = #tpu.dot_dimension_numbers<[1], [0], [0], [1], [0, 0, 1, 1], [], []>} : vector<4x256xf32>, vector<256x64xf32>, vector<4x64xf32> -> vector<4x64xf32>
    %9 = arith.addf %4, %8 : vector<4x64xf32>
    %c0_8 = arith.constant 0 : index
    %c0_9 = arith.constant 0 : index
    %c0_10 = arith.constant 0 : index
    %10 = vector.load %arg4[%c0_8, %c0_9, %c0_10] : memref<1x4x64xf32, #tpu.memory_space<vmem>>, vector<1x4x64xf32>
    %11 = vector.shape_cast %10 : vector<1x4x64xf32> to vector<4x64xf32>
    %12 = vector.shape_cast %9 : vector<4x64xf32> to vector<1x4x64xf32>
    tpu.vector_store %arg4[%c0_8, %c0_9, %c0_10], %12 {strides = array<i32>} : memref<1x4x64xf32, #tpu.memory_space<vmem>>, vector<1x4x64xf32>,
    return
  }
  func.func @transform_0(%arg0: i32, %arg1: i32) -> (i32, i32, i32) {
    %c0_i32 = arith.constant 0 : i32
    %c0_i32_0 = arith.constant 0 : i32
    return %arg0, %c0_i32, %arg1 : i32, i32, i32
  }
  func.func @transform_1(%arg0: i32, %arg1: i32) -> (i32, i32) {
    %c0_i32 = arith.constant 0 : i32
    %c0_i32_0 = arith.constant 0 : i32
    return %arg1, %c0_i32 : i32, i32
  }
  func.func @transform_2(%arg0: i32, %arg1: i32) -> (i32, i32, i32) {
    %c0_i32 = arith.constant 0 : i32
    %c0_i32_0 = arith.constant 0 : i32
    %c0_i32_1 = arith.constant 0 : i32
    return %arg0, %c0_i32, %c0_i32_0 : i32, i32, i32
  }
}

</mosaic_0001>

<llo_original>
// kernel: tpu_custom_call.1
$region0: #{tpu_custom_call.1}
  #allocation0 [shape = 'u32[]', space=smem, size = 0x4, offset = 0x4, fixed_abs, tag = 'smem constant byte address 0x4 - core index']
  #allocation1 [shape = 'u32[72,128]{1,0:T(1,128)}', space=vmem, size = 0x9000, scoped, tag = 'internal scratch']
  %s0 = inlined_call_operand.vmem [shape: f32[2,4,256], index: 0, kind: input, shape index: {}]
  %s1 = inlined_call_operand.vmem [shape: f32[256,64], index: 1, kind: input, shape index: {}]
  %s2 = inlined_call_operand.hbm [shape: f32[2,4,64], index: 2, kind: output, shape index: {}]
  %s3 = sld [smem:[#allocation0]]
  $region45: #{tpu_custom_call.1} parent=0
    _
  %s5 = ssub.s32 1, %s3
  %s6 = scalar_select 0, %s5, %s3
  $region1: #{tpu_custom_call.1} parent=0
    #allocation2 [shape = 'u8[4096]{0}', space=vmem, size = 0x1000, scoped, tag = 'output window, operand 0']
    #allocation3 [shape = 's32[2]{0}', space=sflag, size = 0x8, scoped, tag = 'scoped memory for tpu_custom_call.1']
    %7 = vsyncpa [#allocation3], 0
    %s8 = scalar_lea.sflag [#allocation3], 1
    %9 = vsyncpa %s8, 0
    loop: start=0, step=1, limit=4
    $region2: #{tpu_custom_call.1} parent=1 // loop_pre_header
      _
    $region3: #{tpu_custom_call.1} parent=1 // loop_header
      %s11 = sphi 0, %s15
      %p12 = scmp.ge.s32.totalorder %s11, 4
      %s18 = sphi 0, %s30
      %s19 = sphi 0, %s26
      %s20 = sphi 0, %s18
      %s21 = sphi 0, %s19
      %s22 = sphi 0, %s20
      %s23 = sphi 0, %s21
      %s35 = sphi 0, %s37
      %s38 = sphi 0, %s35
      %s39 = sphi 0, %s38
      %s55 = sphi 0, %s39
      %s61 = sphi 0, %s63
      %s64 = sphi 0, %s61
      %s65 = sphi 0, %s64
      %s81 = sphi 0, %s65
      %s87 = sphi 0, %s89
      %s90 = sphi 0, %s87
      %s91 = sphi 0, %s90
      %s107 = sphi 0, %s91
    $region4: #{tpu_custom_call.1} parent=1 // loop_header_branch
      %14 = sbr.rel (%p12) target = $region8
    $region5: #{tpu_custom_call.1} parent=1 // loop_body
      %s16 = ssub.s32 %s11, 1
      %s17 = ssub.s32 %s11, 2
      %s24 = sadd.s32 1, %s19
      %p25 = scmp.ge.s32.totalorder %s24, 1
      %s26 = scalar_select %p25, 0, %s24
      %s27 = sadd.s32 1, %s18
      %s28 = scalar_select %p25, %s27, %s18
      %p29 = scmp.ge.s32.totalorder %s28, 2
      %s30 = scalar_select %p29, 0, %s28
      %s31 = ssub.s32 %s18, %s30
      %s32 = ssub.s32 %s19, %s26
      %s33 = sor.u32 %s31, %s32
      %p34 = scmp.eq.s32.totalorder %s33, 0
      %s36 = sadd.s32 %s35, 1
      %s37 = scalar_select %p34, %s35, %s36
      %p40 = pneg %p34
      %p41 = scmp.eq.s32.totalorder %s11, 1
      %p42 = por %p40, %p41
      %p43 = scmp.ne.s32.totalorder %s35, %s38
      %p44 = scmp.eq.s32.totalorder %s11, 0
      %p45 = por %p43, %p44
      %p46 = scmp.ne.s32.totalorder %s35, %s38
      %p47 = scmp.eq.s32.totalorder %s16, 1
      %p48 = por %p46, %p47
      %p49 = scmp.ne.s32.totalorder %s38, %s39
      %p50 = scmp.eq.s32.totalorder %s16, 0
      %p51 = por %p49, %p50
      %p52 = scmp.ne.s32.totalorder %s38, %s39
      %p53 = scmp.eq.s32.totalorder %s17, 1
      %p54 = por %p52, %p53
      %p56 = scmp.ne.s32.totalorder %s39, %s55
      %p57 = scmp.eq.s32.totalorder %s17, 0
      %p58 = por %p56, %p57
      %s59 = ssub.s32 %s19, %s26
      %p60 = scmp.eq.s32.totalorder %s59, 0
      %s62 = sadd.s32 %s61, 1
      %s63 = scalar_select %p60, %s61, %s62
      %p66 = pneg %p60
      %p67 = scmp.eq.s32.totalorder %s11, 1
      %p68 = por %p66, %p67
      %p69 = scmp.ne.s32.totalorder %s61, %s64
      %p70 = scmp.eq.s32.totalorder %s11, 0
      %p71 = por %p69, %p70
      %p72 = scmp.ne.s32.totalorder %s61, %s64
      %p73 = scmp.eq.s32.totalorder %s16, 1
      %p74 = por %p72, %p73
      %p75 = scmp.ne.s32.totalorder %s64, %s65
      %p76 = scmp.eq.s32.totalorder %s16, 0
      %p77 = por %p75, %p76
      %p78 = scmp.ne.s32.totalorder %s64, %s65
      %p79 = scmp.eq.s32.totalorder %s17, 1
      %p80 = por %p78, %p79
      %p82 = scmp.ne.s32.totalorder %s65, %s81
      %p83 = scmp.eq.s32.totalorder %s17, 0
      %p84 = por %p82, %p83
      %s85 = ssub.s32 %s18, %s30
      %p86 = scmp.eq.s32.totalorder %s85, 0
      %s88 = sadd.s32 %s87, 1
      %s89 = scalar_select %p86, %s87, %s88
      %p92 = pneg %p86
      %p93 = scmp.eq.s32.totalorder %s11, 1
      %p94 = por %p92, %p93
      %p95 = scmp.ne.s32.totalorder %s87, %s90
      %p96 = scmp.eq.s32.totalorder %s11, 0
      %p97 = por %p95, %p96
      %p98 = scmp.ne.s32.totalorder %s87, %s90
      %p99 = scmp.eq.s32.totalorder %s16, 1
      %p100 = por %p98, %p99
      %p101 = scmp.ne.s32.totalorder %s90, %s91
      %p102 = scmp.eq.s32.totalorder %s16, 0
      %p103 = por %p101, %p102
      %p104 = scmp.ne.s32.totalorder %s90, %s91
      %p105 = scmp.eq.s32.totalorder %s17, 1
      %p106 = por %p104, %p105
      %p108 = scmp.ne.s32.totalorder %s91, %s107
      %p109 = scmp.eq.s32.totalorder %s17, 0
      %p110 = por %p108, %p109
      %p111 = scmp.le.s32.totalorder 1, %s11
      %p112 = scmp.lt.s32.totalorder %s11, 3
      %p113 = pnand %p111, %p112
      %p114 = pneg %p113
      // Predicated region
      $region9: #{tpu_custom_call.1} parent=5 // pred_check
        _
      $region10: #{tpu_custom_call.1} parent=5 // pred_check_branch
        %116 = sbr.rel (%p113) target = $region12
      $region11: #{tpu_custom_call.1} parent=5 // pred_region
        %s117 = ssub.s32 %s11, 1
        // Predicated region
        $region13: #{tpu_custom_call.1} parent=11 // pred_check
          %p118 = pneg %p77
        $region14: #{tpu_custom_call.1} parent=11 // pred_check_branch
          %120 = sbr.rel (%p118) target = $region16
        $region15: #{tpu_custom_call.1} parent=11 // pred_region
          %s121 = smul.u32 32, %s21
          %p122 = scmp.lt.s32.totalorder %s121, 31
          %s123 = scalar_select %p122, %s121, 31
          %s124 = smul.addr %s123, 8
          %s125 = scalar_lea.vmem %s1, %s124
          %s126 = smul.u32 32, %s21
        $region16: #{tpu_custom_call.1} parent=11 // pred_fallthru
          _
      $region12: #{tpu_custom_call.1} parent=5 // pred_fallthru
        _
      %p127 = scmp.lt.s32.totalorder %s11, 2
      // Predicated region
      $region17: #{tpu_custom_call.1} parent=5 // pred_check
        %p128 = pneg %p127
      $region18: #{tpu_custom_call.1} parent=5 // pred_check_branch
        %130 = sbr.rel (%p128) target = $region20
      $region19: #{tpu_custom_call.1} parent=5 // pred_region
        // Predicated region
        $region21: #{tpu_custom_call.1} parent=19 // pred_check
          %p131 = pneg %p45
        $region22: #{tpu_custom_call.1} parent=19 // pred_check_branch
          %133 = sbr.rel (%p131) target = $region24
        $region23: #{tpu_custom_call.1} parent=19 // pred_region
          %s134 = smul.u32 2, %s19
          %p135 = scmp.lt.s32.totalorder %s18, 1
          %s136 = scalar_select %p135, %s18, 1
          %p137 = scmp.lt.s32.totalorder %s134, 1
          %s138 = scalar_select %p137, %s134, 1
          %s139 = smul.addr %s136, 2
          %s140 = sadd.s32 %s138, %s139
          %s141 = smul.addr %s140, 4
          %s142 = scalar_lea.vmem %s0, %s141
          %s143 = smul.u32 2, %s19
        $region24: #{tpu_custom_call.1} parent=19 // pred_fallthru
          _
      $region20: #{tpu_custom_call.1} parent=5 // pred_fallthru
        _
      %p144 = scmp.le.s32.totalorder 1, %s11
      %p145 = scmp.lt.s32.totalorder %s11, 3
      %p146 = pnand %p144, %p145
      %p147 = pneg %p146
      // Predicated region
      $region25: #{tpu_custom_call.1} parent=5 // pred_check
        _
      $region26: #{tpu_custom_call.1} parent=5 // pred_check_branch
        %149 = sbr.rel (%p146) target = $region28
      $region27: #{tpu_custom_call.1} parent=5 // pred_region
        %s150 = ssub.s32 %s11, 1
        %s151 = smul.u32 2, %s21
        %p152 = scmp.lt.s32.totalorder %s20, 1
        %s153 = scalar_select %p152, %s20, 1
        %p154 = scmp.lt.s32.totalorder %s151, 1
        %s155 = scalar_select %p154, %s151, 1
        %s156 = smul.addr %s153, 2
        %s157 = sadd.s32 %s155, %s156
        %s158 = smul.addr %s157, 4
        %s159 = scalar_lea.vmem %s0, %s158
        %p160 = pneg %p51
        %p161 = pneg %p48
        %s162 = smul.u32 32, %s21
        %p163 = scmp.lt.s32.totalorder %s162, 31
        %s164 = scalar_select %p163, %s162, 31
        %s165 = smul.addr %s164, 8
        %s166 = scalar_lea.vmem %s1, %s165
        %p167 = pneg %p77
        %p168 = pneg %p74
        %p169 = pneg %p103
        %p170 = pneg %p100
        %s171 = sand.u32 %s90, 1
        %s172 = scalar_lea.sflag [#allocation3], %s171
        %s173 = sand.u32 %s90, 1
        %s174 = smul.addr %s173, 4
        %s175 = scalar_lea.vmem [#allocation2], %s174
        %s176 = smul.u32 2, %s21
        %p177 = scmp.lt.s32.totalorder %s20, 1
        %s178 = scalar_select %p177, %s20, 1
        %p179 = scmp.lt.s32.totalorder %s176, 1
        %s180 = scalar_select %p179, %s176, 1
        %s181 = smul.addr %s178, 2
        %s182 = sadd.s32 %s180, %s181
        %s183 = smul.addr %s182, 4
        %s184 = scalar_lea.vmem %s0, %s183
        %s185 = smul.u32 2, %s21
        %s186 = smul.u32 32, %s21
        %p187 = scmp.lt.s32.totalorder %s186, 31
        %s188 = scalar_select %p187, %s186, 31
        %s189 = smul.addr %s188, 8
        %s190 = scalar_lea.vmem %s1, %s189
        %s191 = smul.u32 32, %s21
        %p192 = scmp.eq.s32.totalorder %s21, 0
        // Predicated region
        $region29: #{tpu_custom_call.1} parent=27 // pred_check
          %p193 = pneg %p192
        $region30: #{tpu_custom_call.1} parent=27 // pred_check_branch
          %195 = sbr.rel (%p193) target = $region32
        $region31: #{tpu_custom_call.1} parent=27 // pred_region
          %vm196 = vcmask 519168
          %197 = vst.msk [vmem:[%s175] sm:$0xf] %vm196, 0.0
        $region32: #{tpu_custom_call.1} parent=27 // pred_fallthru
          _
        %v198 = vld [vmem:[%s175] sm:$0xf]
        %v199 = vld [vmem:[%s184] sm:$0xff]
        %v200 = vld [vmem:[%s190] sm:$0xff]
        %v201 = vld [vmem:[%s190 + $0x8] sm:$0xff]
        %v202 = vld [vmem:[%s190 + $0x10] sm:$0xff]
        %v203 = vld [vmem:[%s190 + $0x18] sm:$0xff]
        %v204 = vld [vmem:[%s190 + $0x20] sm:$0xff]
        %v205 = vld [vmem:[%s190 + $0x28] sm:$0xff]
        %v206 = vld [vmem:[%s190 + $0x30] sm:$0xff]
        %v207 = vld [vmem:[%s190 + $0x38] sm:$0xff]
        %v208 = vld [vmem:[%s190 + $0x40] sm:$0xff]
        %v209 = vld [vmem:[%s190 + $0x48] sm:$0xff]
        %v210 = vld [vmem:[%s190 + $0x50] sm:$0xff]
        %v211 = vld [vmem:[%s190 + $0x58] sm:$0xff]
        %v212 = vld [vmem:[%s190 + $0x60] sm:$0xff]
        %v213 = vld [vmem:[%s190 + $0x68] sm:$0xff]
        %v214 = vld [vmem:[%s190 + $0x70] sm:$0xff]
        %v215 = vld [vmem:[%s190 + $0x78] sm:$0xff]
        %v216 = vld [vmem:[%s190 + $0x80] sm:$0xff]
        %v217 = vld [vmem:[%s190 + $0x88] sm:$0xff]
        %v218 = vld [vmem:[%s190 + $0x90] sm:$0xff]
        %v219 = vld [vmem:[%s190 + $0x98] sm:$0xff]
        %v220 = vld [vmem:[%s190 + $0xa0] sm:$0xff]
        %v221 = vld [vmem:[%s190 + $0xa8] sm:$0xff]
        %v222 = vld [vmem:[%s190 + $0xb0] sm:$0xff]
        %v223 = vld [vmem:[%s190 + $0xb8] sm:$0xff]
        %v224 = vld [vmem:[%s190 + $0xc0] sm:$0xff]
        %v225 = vld [vmem:[%s190 + $0xc8] sm:$0xff]
        %v226 = vld [vmem:[%s190 + $0xd0] sm:$0xff]
        %v227 = vld [vmem:[%s190 + $0xd8] sm:$0xff]
        %v228 = vld [vmem:[%s190 + $0xe0] sm:$0xff]
        %v229 = vld [vmem:[%s190 + $0xe8] sm:$0xff]
        %v230 = vld [vmem:[%s190 + $0xf0] sm:$0xff]
        %v231 = vld [vmem:[%s190 + $0xf8] sm:$0xff]
        %233 = vst [vmem:[#allocation1] ss:$2 sm:$0xff] %v199
        %v234 = vld.sshfl [vmem:[#allocation1] sm:$0xff pattern:$0x75316420]
        %v235 = vld.sshfl [vmem:[#allocation1 + $0x8] sm:$0xff pattern:$0x75316420]
        %238 = vmatpush.msra.mxu0 %v215
        %239 = vmatpush.msra.mxu0 %v214
        %240 = vmatpush.msra.mxu0 %v213
        %241 = vmatpush.msra.mxu0 %v212
        %242 = vmatpush.msra.mxu0 %v211
        %243 = vmatpush.msra.mxu0 %v210
        %244 = vmatpush.msra.mxu0 %v209
        %245 = vmatpush.msra.mxu0 %v208
        %246 = vmatpush.msra.mxu0 %v207
        %247 = vmatpush.msra.mxu0 %v206
        %248 = vmatpush.msra.mxu0 %v205
        %249 = vmatpush.msra.mxu0 %v204
        %250 = vmatpush.msra.mxu0 %v203
        %251 = vmatpush.msra.mxu0 %v202
        %252 = vmatpush.msra.mxu0 %v201
        %253 = vmatpush.msra.mxu0 %v200
        %254 = vmatmul.f32.gmra.mxu0 %v234
        %v255 = vpop.f32.mrf.mxu0
        %v256 = vadd.f32 0.0, %v255
        %257 = vdwg.mxu0
        %258 = vmatpush.msra.mxu0 %v231
        %259 = vmatpush.msra.mxu0 %v230
        %260 = vmatpush.msra.mxu0 %v229
        %261 = vmatpush.msra.mxu0 %v228
        %262 = vmatpush.msra.mxu0 %v227
        %263 = vmatpush.msra.mxu0 %v226
        %264 = vmatpush.msra.mxu0 %v225
        %265 = vmatpush.msra.mxu0 %v224
        %266 = vmatpush.msra.mxu0 %v223
        %267 = vmatpush.msra.mxu0 %v222
        %268 = vmatpush.msra.mxu0 %v221
        %269 = vmatpush.msra.mxu0 %v220
        %270 = vmatpush.msra.mxu0 %v219
        %271 = vmatpush.msra.mxu0 %v218
        %272 = vmatpush.msra.mxu0 %v217
        %273 = vmatpush.msra.mxu0 %v216
        %274 = vmatmul.f32.gmra.mxu0 %v235
        %v275 = vpop.f32.mrf.mxu0
        %v276 = vadd.f32 %v256, %v275
        %277 = vdwg.mxu0
        %v278 = vadd.f32 %v198, %v276
        %vm279 = vcmask 519168
        %280 = vst.msk [vmem:[%s175] sm:$0xf] %vm279, %v278
        %s281 = sand.u32 %s90, 1
        %s282 = scalar_lea.sflag [#allocation3], %s281
        %s283 = sand.u32 %s90, 1
        %s284 = smul.addr %s283, 4
        %s285 = scalar_lea.vmem [#allocation2], %s284
        // Predicated region
        $region33: #{tpu_custom_call.1} parent=27 // pred_check
          %p286 = pneg %p100
        $region34: #{tpu_custom_call.1} parent=27 // pred_check_branch
          %288 = sbr.rel (%p286) target = $region36
        $region35: #{tpu_custom_call.1} parent=27 // pred_region
          %290 = vsyncadd %s282, 0
          %s291 = smul.addr %s20, 4
          %s292 = scalar_lea.hbm %s2, %s291
          %s294 = sshll.u32 %s285, 4
          %s295 = int_to_ptr.vmem [resolvable:$true] %s294
          %s296 = sshll.u32 %s292, 4
          %s297 = int_to_ptr.hbm [resolvable:$true] %s296
          %299 = dma.vmem_to_hbm [thread:$0]  %s295, 64, %s297, %s282
        $region36: #{tpu_custom_call.1} parent=27 // pred_fallthru
          _
      $region28: #{tpu_custom_call.1} parent=5 // pred_fallthru
        _
      %p300 = scmp.le.s32.totalorder 2, %s11
      // Predicated region
      $region37: #{tpu_custom_call.1} parent=5 // pred_check
        %p301 = pneg %p300
      $region38: #{tpu_custom_call.1} parent=5 // pred_check_branch
        %303 = sbr.rel (%p301) target = $region40
      $region39: #{tpu_custom_call.1} parent=5 // pred_region
        %s304 = ssub.s32 %s11, 2
        // Predicated region
        $region41: #{tpu_custom_call.1} parent=39 // pred_check
          %p305 = pneg %p106
        $region42: #{tpu_custom_call.1} parent=39 // pred_check_branch
          %307 = sbr.rel (%p305) target = $region44
        $region43: #{tpu_custom_call.1} parent=39 // pred_region
          %s308 = sand.u32 %s91, 1
          %s309 = scalar_lea.sflag [#allocation3], %s308
          %s310 = sand.u32 %s91, 1
          %s311 = smul.addr %s310, 4
          %s312 = scalar_lea.vmem [#allocation2], %s311
          %314 = dma.done %s309, 64
        $region44: #{tpu_custom_call.1} parent=39 // pred_fallthru
          _
      $region40: #{tpu_custom_call.1} parent=5 // pred_fallthru
        _
    $region6: #{tpu_custom_call.1} parent=1 // loop_footer
      %s15 = sadd.s32 1, %s11
    $region7: #{tpu_custom_call.1} parent=1 // loop_footer_branch
      %10 = sbr.rel target = $region3
    $region8: #{tpu_custom_call.1} parent=1 // loop_exit
      _
    %315 = vsyncpa [#allocation3], 1
    %s316 = scalar_lea.sflag [#allocation3], 1
    %317 = vsyncpa %s316, 1

</llo_original>
